<compile_context>
chip_gen: v6e
topology: v6e:2x2x1
jax: 0.10.0
libtpu: 0.0.40
codegen_flags: <defaults>
</compile_context>

<pallas_src>
import functools

import jax
import jax.numpy as jnp
from jax.experimental import pallas as pl
from jax.experimental.pallas import tpu as pltpu

LANE = 128
SUBLANE = 8


def _round_up(n: int, m: int) -> int:
    return ((n + m - 1) // m) * m


# ---------------------------------------------------------------------------
# Kernel: single fused matmul + log_softmax over the batch axis (dim=0).
# Entire batch lives in one block (required for the dim=0 reduction).
# ---------------------------------------------------------------------------
def classifier_kernel(x_ref, w_ref, out_ref):
    # (B, K_pad) @ (K_pad, O_pad) -> (B, O_pad), f32 accumulation on the MXU.
    y = jnp.dot(x_ref[...], w_ref[...], preferred_element_type=jnp.float32)

    # Numerically stable log_softmax over dim=0 (batch axis), single folded subtract.
    m = jnp.max(y, axis=0, keepdims=True)                                  # (1, O_pad)
    total = m + jnp.log(jnp.sum(jnp.exp(y - m), axis=0, keepdims=True))    # (1, O_pad)
    out_ref[...] = (y - total).astype(out_ref.dtype)


# ---------------------------------------------------------------------------
# Parameter preparation (offline, once per parameter set):
#   - collapse the two Linear layers (bias dropped: it cancels under dim=0 softmax)
#   - zero-pad K (contraction) to a 128 multiple and O (output) to a 128 multiple
# ---------------------------------------------------------------------------
def prepare_params(w1, w2):
    """w1:(305,1000), w2:(1000,O)  ->  W_eff zero-padded to (K_pad, O_pad)."""
    hp = jax.lax.Precision.HIGHEST
    in_features, _ = w1.shape
    out = w2.shape[1]
    w_eff = jnp.dot(w1, w2, precision=hp)                # (305, O)
    k_pad = _round_up(max(in_features, 1), LANE)         # 305 -> 384
    o_pad = _round_up(max(out, 1), LANE)                 # 10  -> 128
    w_eff = jnp.pad(w_eff, ((0, k_pad - in_features), (0, o_pad - out)))
    return w_eff


# ---------------------------------------------------------------------------
# Forward wrapper.
# ---------------------------------------------------------------------------
@functools.partial(jax.jit, static_argnames=("out_features",))
def classifier_forward(x, w_eff, out_features):
    """x: (B, 305) f32; w_eff: (K_pad, O_pad) f32.  Returns (B, out_features)."""
    B, K = x.shape
    k_pad, o_pad = w_eff.shape

    # Lane-dense contraction dim: pad x columns with zeros (matching zero W rows).
    if K != k_pad:
        x = jnp.pad(x, ((0, 0), (0, k_pad - K)))

    # Advisory cost model so XLA can schedule/overlap this tiny custom call.
    cost = pl.CostEstimate(
        flops=2 * B * k_pad * o_pad,
        transcendentals=B * o_pad,
        bytes_accessed=4 * (B * k_pad + k_pad * o_pad + B * o_pad),
    )

    # Explicit scoped-VMEM budget: single-block footprint + headroom, capped below
    # the v7x physical VMEM (64 MiB) so the same config compiles on every generation.
    footprint = 4 * (B * k_pad + k_pad * o_pad + B * o_pad)
    vmem_limit = int(min(max(2 * footprint + (1 << 20), 4 << 20), 60 << 20))

    out_padded = pl.pallas_call(
        classifier_kernel,
        out_shape=jax.ShapeDtypeStruct((B, o_pad), jnp.float32),
        # Whole arrays as single VMEM-resident blocks (no grid: softmax over dim=0
        # requires the full batch in one block).
        in_specs=[
            pl.BlockSpec(memory_space=pltpu.MemorySpace.VMEM),
            pl.BlockSpec(memory_space=pltpu.MemorySpace.VMEM),
        ],
        out_specs=pl.BlockSpec(memory_space=pltpu.MemorySpace.VMEM),
        cost_estimate=cost,
        compiler_params=pltpu.CompilerParams(vmem_limit_bytes=vmem_limit),
    )(x, w_eff)
    return out_padded[:, :out_features]


# ---------------------------------------------------------------------------
# PyTorch-style init + pure-JAX reference of the ORIGINAL two-layer forward.
# ---------------------------------------------------------------------------
def init_params(key, in_features=305, hidden=1000, output=10):
    """Deterministic PyTorch-style (uniform +-1/sqrt(fan_in)) initialization."""
    k1, k2, k3, k4 = jax.random.split(key, 4)
    bound1 = 1.0 / jnp.sqrt(in_features)
    bound2 = 1.0 / jnp.sqrt(hidden)
    # Stored as (in, out) == transpose of torch's (out, in) weight layout.
    w1 = jax.random.uniform(k1, (in_features, hidden), jnp.float32, -bound1, bound1)
    b1 = jax.random.uniform(k2, (1, hidden), jnp.float32, -bound1, bound1)
    w2 = jax.random.uniform(k3, (hidden, output), jnp.float32, -bound2, bound2)
    b2 = jax.random.uniform(k4, (1, output), jnp.float32, -bound2, bound2)
    return w1, b1, w2, b2


def reference_forward(x, w1, b1, w2, b2):
    """Pure-JAX reference mirroring the PyTorch forward (log_softmax over dim=0)."""
    hp = jax.lax.Precision.HIGHEST
    y = jnp.dot(x, w1, precision=hp) + b1
    y = jnp.dot(y, w2, precision=hp) + b2
    return jax.nn.log_softmax(y, axis=0)


if __name__ == "__main__":
    key = jax.random.PRNGKey(0)
    k_params, k_x = jax.random.split(key)

    B, IN, HID, OUT = 8, 305, 1000, 10
    w1, b1, w2, b2 = init_params(k_params, IN, HID, OUT)
    x = jax.random.normal(k_x, (B, IN), jnp.float32)

    # One-time parameter preparation (layer collapse + K/O lane padding; bias dropped —
    # it cancels exactly under log_softmax over dim=0).
    w_eff = prepare_params(w1, w2)

    out = classifier_forward(x, w_eff, OUT)
    out = jax.block_until_ready(out)

    ref = reference_forward(x, w1, b1, w2, b2)
    assert out.shape == (B, OUT)
    assert jnp.allclose(out, ref, atol=1e-4, rtol=1e-4), "mismatch vs reference"

    print("KERNEL_OK")
</pallas_src>

<mosaic_0001>
module attributes {stable_mosaic.version = 11 : i64} {
  func.func @classifier_kernel(%arg0: memref<8x384xf32, #tpu.memory_space<vmem>>, %arg1: memref<384x128xf32, #tpu.memory_space<vmem>>, %arg2: memref<8x128xf32, #tpu.memory_space<vmem>>) attributes {dimension_semantics = [], scalar_prefetch = 0 : i64, scratch_operands = 0 : i64, tpu.core_type = #tpu.core_type<tc>} {
    %c0 = arith.constant 0 : index
    %c0_0 = arith.constant 0 : index
    %0 = vector.load %arg0[%c0, %c0_0] : memref<8x384xf32, #tpu.memory_space<vmem>>, vector<8x384xf32>
    %c0_1 = arith.constant 0 : index
    %c0_2 = arith.constant 0 : index
    %1 = vector.load %arg1[%c0_1, %c0_2] : memref<384x128xf32, #tpu.memory_space<vmem>>, vector<384x128xf32>
    %cst = arith.constant dense<0.000000e+00> : vector<8x128xf32>
    %2 = tpu.matmul %0, %1, %cst {dimension_numbers = #tpu.dot_dimension_numbers<[1], [0], [0], [1], [0, 0, 1, 1], [], []>} : vector<8x384xf32>, vector<384x128xf32>, vector<8x128xf32> -> vector<8x128xf32>
    %cst_3 = arith.constant dense<0xFF800000> : vector<128xf32>
    %3 = vector.multi_reduction <maximumf>, %2, %cst_3 [0] : vector<8x128xf32> to vector<128xf32>
    %4 = vector.shape_cast %3 : vector<128xf32> to vector<1x128xf32>
    %5 = vector.broadcast %4 : vector<1x128xf32> to vector<8x128xf32>
    %6 = arith.subf %2, %5 : vector<8x128xf32>
    %7 = math.exp %6 : vector<8x128xf32>
    %cst_4 = arith.constant dense<0.000000e+00> : vector<128xf32>
    %8 = vector.multi_reduction <add>, %7, %cst_4 [0] : vector<8x128xf32> to vector<128xf32>
    %9 = vector.shape_cast %8 : vector<128xf32> to vector<1x128xf32>
    %10 = math.log %9 : vector<1x128xf32>
    %11 = arith.addf %4, %10 : vector<1x128xf32>
    %12 = vector.broadcast %11 : vector<1x128xf32> to vector<8x128xf32>
    %13 = arith.subf %2, %12 : vector<8x128xf32>
    %c0_5 = arith.constant 0 : index
    %c0_6 = arith.constant 0 : index
    %14 = vector.load %arg2[%c0_5, %c0_6] : memref<8x128xf32, #tpu.memory_space<vmem>>, vector<8x128xf32>
    tpu.vector_store %arg2[%c0_5, %c0_6], %13 {strides = array<i32>} : memref<8x128xf32, #tpu.memory_space<vmem>>, vector<8x128xf32>,
    return
  }
}

</mosaic_0001>

<llo_original>
// kernel: classifier_forward.1
$region0: #{classifier_forward.1}
  #allocation0 [shape = 'u32[]', space=smem, size = 0x4, offset = 0x4, fixed_abs, tag = 'smem constant byte address 0x4 - core index']
  #allocation1 [shape = 'u32[144,128]{1,0:T(1,128)}', space=vmem, size = 0x12000, scoped, tag = 'internal scratch']
  %s0 = inlined_call_operand.vmem [shape: f32[8,384], index: 0, kind: input, shape index: {}]
  %s1 = inlined_call_operand.hbm [shape: f32[384,128], index: 1, kind: input, shape index: {}]
  %s2 = inlined_call_operand.hbm [shape: f32[8,128], index: 2, kind: output, shape index: {}]
  %s3 = sld [smem:[#allocation0]]
  $region22: #{classifier_forward.1} parent=0
    _
  %s5 = ssub.s32 1, %s3
  %s6 = scalar_select 0, %s5, %s3
  $region1: #{classifier_forward.1} parent=0
    #allocation2 [shape = 'u8[196608]{0}', space=vmem, size = 0x30000, scoped, tag = 'input window, operand 1, single buffered']
    #allocation3 [shape = 's32[1]{0}', space=sflag, size = 0x4, scoped, tag = 'scoped memory for classifier_forward.1']
    #allocation4 [shape = 's32[1]{0}', space=sflag, size = 0x4, scoped, tag = 'scoped memory for classifier_forward.1']
    #allocation5 [shape = 'u8[4096]{0}', space=vmem, size = 0x1000, scoped, tag = 'output window, operand 0, single buffered']
    %7 = vsyncpa [#allocation3], 0
    %8 = vsyncpa [#allocation4], 0
    // Predicated region
    $region2: #{classifier_forward.1} parent=1 // pred_check
      _
    $region3: #{classifier_forward.1} parent=1 // pred_check_branch
      %10 = sbr.rel (0) target = $region5
    $region4: #{classifier_forward.1} parent=1 // pred_region
      _
    $region5: #{classifier_forward.1} parent=1 // pred_fallthru
      _
    // Predicated region
    $region6: #{classifier_forward.1} parent=1 // pred_check
      _
    $region7: #{classifier_forward.1} parent=1 // pred_check_branch
      %12 = sbr.rel (0) target = $region9
    $region8: #{classifier_forward.1} parent=1 // pred_region
      %s14 = ssub.s32 6144, 6144
      %15 = vsyncadd [#allocation3], %s14
      %s16 = sshll.u32 [#allocation2], 4
      %s17 = int_to_ptr.vmem [resolvable:$true] %s16
      %22 = dma.hbm_to_vmem [thread:$0]  %s1, 6144, %s17, [#allocation3], 128, 128, 8
    $region9: #{classifier_forward.1} parent=1 // pred_fallthru
      _
    // Predicated region
    $region10: #{classifier_forward.1} parent=1 // pred_check
      _
    $region11: #{classifier_forward.1} parent=1 // pred_check_branch
      %24 = sbr.rel (0) target = $region13
    $region12: #{classifier_forward.1} parent=1 // pred_region
      %25 = dma.done [#allocation3], 6144
    $region13: #{classifier_forward.1} parent=1 // pred_fallthru
      _
    %v26 = vld [vmem:[%s0] sm:$0xff]
    %v27 = vld [vmem:[%s0 + $0x8] sm:$0xff]
    %v28 = vld [vmem:[%s0 + $0x10] sm:$0xff]
    %v29 = vld [vmem:[#allocation2] sm:$0xff]
    %v30 = vld [vmem:[#allocation2 + $0x8] sm:$0xff]
    %v31 = vld [vmem:[#allocation2 + $0x10] sm:$0xff]
    %v32 = vld [vmem:[#allocation2 + $0x18] sm:$0xff]
    %v33 = vld [vmem:[#allocation2 + $0x20] sm:$0xff]
    %v34 = vld [vmem:[#allocation2 + $0x28] sm:$0xff]
    %v35 = vld [vmem:[#allocation2 + $0x30] sm:$0xff]
    %v36 = vld [vmem:[#allocation2 + $0x38] sm:$0xff]
    %v37 = vld [vmem:[#allocation2 + $0x40] sm:$0xff]
    %v38 = vld [vmem:[#allocation2 + $0x48] sm:$0xff]
    %v39 = vld [vmem:[#allocation2 + $0x50] sm:$0xff]
    %v40 = vld [vmem:[#allocation2 + $0x58] sm:$0xff]
    %v41 = vld [vmem:[#allocation2 + $0x60] sm:$0xff]
    %v42 = vld [vmem:[#allocation2 + $0x68] sm:$0xff]
    %v43 = vld [vmem:[#allocation2 + $0x70] sm:$0xff]
    %v44 = vld [vmem:[#allocation2 + $0x78] sm:$0xff]
    %v45 = vld [vmem:[#allocation2 + $0x80] sm:$0xff]
    %v46 = vld [vmem:[#allocation2 + $0x88] sm:$0xff]
    %v47 = vld [vmem:[#allocation2 + $0x90] sm:$0xff]
    %v48 = vld [vmem:[#allocation2 + $0x98] sm:$0xff]
    %v49 = vld [vmem:[#allocation2 + $0xa0] sm:$0xff]
    %v50 = vld [vmem:[#allocation2 + $0xa8] sm:$0xff]
    %v51 = vld [vmem:[#allocation2 + $0xb0] sm:$0xff]
    %v52 = vld [vmem:[#allocation2 + $0xb8] sm:$0xff]
    %v53 = vld [vmem:[#allocation2 + $0xc0] sm:$0xff]
    %v54 = vld [vmem:[#allocation2 + $0xc8] sm:$0xff]
    %v55 = vld [vmem:[#allocation2 + $0xd0] sm:$0xff]
    %v56 = vld [vmem:[#allocation2 + $0xd8] sm:$0xff]
    %v57 = vld [vmem:[#allocation2 + $0xe0] sm:$0xff]
    %v58 = vld [vmem:[#allocation2 + $0xe8] sm:$0xff]
    %v59 = vld [vmem:[#allocation2 + $0xf0] sm:$0xff]
    %v60 = vld [vmem:[#allocation2 + $0xf8] sm:$0xff]
    %v61 = vld [vmem:[#allocation2 + $0x100] sm:$0xff]
    %v62 = vld [vmem:[#allocation2 + $0x108] sm:$0xff]
    %v63 = vld [vmem:[#allocation2 + $0x110] sm:$0xff]
    %v64 = vld [vmem:[#allocation2 + $0x118] sm:$0xff]
    %v65 = vld [vmem:[#allocation2 + $0x120] sm:$0xff]
    %v66 = vld [vmem:[#allocation2 + $0x128] sm:$0xff]
    %v67 = vld [vmem:[#allocation2 + $0x130] sm:$0xff]
    %v68 = vld [vmem:[#allocation2 + $0x138] sm:$0xff]
    %v69 = vld [vmem:[#allocation2 + $0x140] sm:$0xff]
    %v70 = vld [vmem:[#allocation2 + $0x148] sm:$0xff]
    %v71 = vld [vmem:[#allocation2 + $0x150] sm:$0xff]
    %v72 = vld [vmem:[#allocation2 + $0x158] sm:$0xff]
    %v73 = vld [vmem:[#allocation2 + $0x160] sm:$0xff]
    %v74 = vld [vmem:[#allocation2 + $0x168] sm:$0xff]
    %v75 = vld [vmem:[#allocation2 + $0x170] sm:$0xff]
    %v76 = vld [vmem:[#allocation2 + $0x178] sm:$0xff]
    %77 = vmatprep.subr.mxu0 0.0
    %78 = vmatpush1.msra.mxu0 %v44
    %79 = vmatprep.subr.mxu0 0.0
    %80 = vmatpush1.msra.mxu0 %v43
    %81 = vmatprep.subr.mxu0 0.0
    %82 = vmatpush1.msra.mxu0 %v42
    %83 = vmatprep.subr.mxu0 0.0
    %84 = vmatpush1.msra.mxu0 %v41
    %85 = vmatprep.subr.mxu0 0.0
    %86 = vmatpush1.msra.mxu0 %v40
    %87 = vmatprep.subr.mxu0 0.0
    %88 = vmatpush1.msra.mxu0 %v39
    %89 = vmatprep.subr.mxu0 0.0
    %90 = vmatpush1.msra.mxu0 %v38
    %91 = vmatprep.subr.mxu0 0.0
    %92 = vmatpush1.msra.mxu0 %v37
    %93 = vmatprep.subr.mxu0 0.0
    %94 = vmatpush1.msra.mxu0 %v36
    %95 = vmatprep.subr.mxu0 0.0
    %96 = vmatpush1.msra.mxu0 %v35
    %97 = vmatprep.subr.mxu0 0.0
    %98 = vmatpush1.msra.mxu0 %v34
    %99 = vmatprep.subr.mxu0 0.0
    %100 = vmatpush1.msra.mxu0 %v33
    %101 = vmatprep.subr.mxu0 0.0
    %102 = vmatpush1.msra.mxu0 %v32
    %103 = vmatprep.subr.mxu0 0.0
    %104 = vmatpush1.msra.mxu0 %v31
    %105 = vmatprep.subr.mxu0 0.0
    %106 = vmatpush1.msra.mxu0 %v30
    %107 = vmatprep.subr.mxu0 0.0
    %108 = vmatpush1.msra.mxu0 %v29
    %109 = vmatprep.subr.mxu0 0.0
    %110 = vmatpush2.msra.mxu0 %v60
    %111 = vmatprep.subr.mxu0 0.0
    %112 = vmatpush2.msra.mxu0 %v59
    %113 = vmatprep.subr.mxu0 0.0
    %114 = vmatpush2.msra.mxu0 %v58
    %115 = vmatprep.subr.mxu0 0.0
    %116 = vmatpush2.msra.mxu0 %v57
    %117 = vmatprep.subr.mxu0 0.0
    %118 = vmatpush2.msra.mxu0 %v56
    %119 = vmatprep.subr.mxu0 0.0
    %120 = vmatpush2.msra.mxu0 %v55
    %121 = vmatprep.subr.mxu0 0.0
    %122 = vmatpush2.msra.mxu0 %v54
    %123 = vmatprep.subr.mxu0 0.0
    %124 = vmatpush2.msra.mxu0 %v53
    %125 = vmatprep.subr.mxu0 0.0
    %126 = vmatpush2.msra.mxu0 %v52
    %127 = vmatprep.subr.mxu0 0.0
    %128 = vmatpush2.msra.mxu0 %v51
    %129 = vmatprep.subr.mxu0 0.0
    %130 = vmatpush2.msra.mxu0 %v50
    %131 = vmatprep.subr.mxu0 0.0
    %132 = vmatpush2.msra.mxu0 %v49
    %133 = vmatprep.subr.mxu0 0.0
    %134 = vmatpush2.msra.mxu0 %v48
    %135 = vmatprep.subr.mxu0 0.0
    %136 = vmatpush2.msra.mxu0 %v47
    %137 = vmatprep.subr.mxu0 0.0
    %138 = vmatpush2.msra.mxu0 %v46
    %139 = vmatprep.subr.mxu0 0.0
    %140 = vmatpush2.msra.mxu0 %v45
    %141 = vmatprep.mubr.f32.mxu0 %v27
    %142 = vmatmul.mubr.f32.gmra.mxu0 %v26
    %v143 = vpop.f32.mrf.mxu0
    %v144 = vadd.f32 0.0, %v143
    %v145 = vpop.f32.mrf.mxu0
    %146 = vdwg.mxu0
    %147 = vmatprep.subr.mxu0 0.0
    %148 = vmatpush1.msra.mxu0 %v76
    %149 = vmatprep.subr.mxu0 0.0
    %150 = vmatpush1.msra.mxu0 %v75
    %151 = vmatprep.subr.mxu0 0.0
    %152 = vmatpush1.msra.mxu0 %v74
    %153 = vmatprep.subr.mxu0 0.0
    %154 = vmatpush1.msra.mxu0 %v73
    %155 = vmatprep.subr.mxu0 0.0
    %156 = vmatpush1.msra.mxu0 %v72
    %157 = vmatprep.subr.mxu0 0.0
    %158 = vmatpush1.msra.mxu0 %v71
    %159 = vmatprep.subr.mxu0 0.0
    %160 = vmatpush1.msra.mxu0 %v70
    %161 = vmatprep.subr.mxu0 0.0
    %162 = vmatpush1.msra.mxu0 %v69
    %163 = vmatprep.subr.mxu0 0.0
    %164 = vmatpush1.msra.mxu0 %v68
    %165 = vmatprep.subr.mxu0 0.0
    %166 = vmatpush1.msra.mxu0 %v67
    %167 = vmatprep.subr.mxu0 0.0
    %168 = vmatpush1.msra.mxu0 %v66
    %169 = vmatprep.subr.mxu0 0.0
    %170 = vmatpush1.msra.mxu0 %v65
    %171 = vmatprep.subr.mxu0 0.0
    %172 = vmatpush1.msra.mxu0 %v64
    %173 = vmatprep.subr.mxu0 0.0
    %174 = vmatpush1.msra.mxu0 %v63
    %175 = vmatprep.subr.mxu0 0.0
    %176 = vmatpush1.msra.mxu0 %v62
    %177 = vmatprep.subr.mxu0 0.0
    %178 = vmatpush1.msra.mxu0 %v61
    %179 = vmatprep.subr.mxu0 0.0
    %180 = vmatpush2.msra.mxu0 0.0
    %181 = vmatprep.subr.mxu0 0.0
    %182 = vmatpush2.msra.mxu0 0.0
    %183 = vmatprep.subr.mxu0 0.0
    %184 = vmatpush2.msra.mxu0 0.0
    %185 = vmatprep.subr.mxu0 0.0
    %186 = vmatpush2.msra.mxu0 0.0
    %187 = vmatprep.subr.mxu0 0.0
    %188 = vmatpush2.msra.mxu0 0.0
    %189 = vmatprep.subr.mxu0 0.0
    %190 = vmatpush2.msra.mxu0 0.0
    %191 = vmatprep.subr.mxu0 0.0
    %192 = vmatpush2.msra.mxu0 0.0
    %193 = vmatprep.subr.mxu0 0.0
    %194 = vmatpush2.msra.mxu0 0.0
    %195 = vmatprep.subr.mxu0 0.0
    %196 = vmatpush2.msra.mxu0 0.0
    %197 = vmatprep.subr.mxu0 0.0
    %198 = vmatpush2.msra.mxu0 0.0
    %199 = vmatprep.subr.mxu0 0.0
    %200 = vmatpush2.msra.mxu0 0.0
    %201 = vmatprep.subr.mxu0 0.0
    %202 = vmatpush2.msra.mxu0 0.0
    %203 = vmatprep.subr.mxu0 0.0
    %204 = vmatpush2.msra.mxu0 0.0
    %205 = vmatprep.subr.mxu0 0.0
    %206 = vmatpush2.msra.mxu0 0.0
    %207 = vmatprep.subr.mxu0 0.0
    %208 = vmatpush2.msra.mxu0 0.0
    %209 = vmatprep.subr.mxu0 0.0
    %210 = vmatpush2.msra.mxu0 0.0
    %211 = vmatprep.mubr.f32.mxu0 0.0
    %212 = vmatmul.mubr.f32.gmra.mxu0 %v28
    %v213 = vpop.f32.mrf.mxu0
    %v214 = vadd.f32 %v144, %v213
    %v215 = vpop.f32.mrf.mxu0
    %216 = vdwg.mxu0
    %v217 = vrot.slane %v214, 4
    %v218 = vmax.f32 %v214, %v217
    %v219 = vrot.slane %v218, 2
    %v220 = vmax.f32 %v218, %v219
    %v221 = vrot.slane %v220, 1
    %v222 = vmax.f32 %v220, %v221
    %v223 = vsub.f32 %v214, %v222
    %v224 = vmul.f32 %v223, 1.442695
    %v225 = vpow.pop %v224
    %v226 = vrot.slane %v225, 4
    %v227 = vadd.f32 %v225, %v226
    %v228 = vrot.slane %v227, 2
    %v229 = vadd.f32 %v227, %v228
    %v230 = vrot.slane %v229, 1
    %v231 = vadd.f32 %v229, %v230
    %v232 = vlog2.pop %v231
    %v233 = vmul.f32 %v232, 0.6931472
    %v234 = vadd.f32 %v222, %v233
    %v235 = vsub.f32 %v214, %v234
    %236 = vst [vmem:[#allocation5] sm:$0xff] %v235
    // Predicated region
    $region14: #{classifier_forward.1} parent=1 // pred_check
      _
    $region15: #{classifier_forward.1} parent=1 // pred_check_branch
      %238 = sbr.rel (0) target = $region17
    $region16: #{classifier_forward.1} parent=1 // pred_region
      %s240 = ssub.s32 128, 128
      %241 = vsyncadd [#allocation4], %s240
      %s243 = sshll.u32 [#allocation5], 4
      %s244 = int_to_ptr.vmem [resolvable:$true] %s243
      %246 = dma.vmem_to_hbm [thread:$0]  %s244, 128, %s2, [#allocation4]
    $region17: #{classifier_forward.1} parent=1 // pred_fallthru
      _
    // Predicated region
    $region18: #{classifier_forward.1} parent=1 // pred_check
      _
    $region19: #{classifier_forward.1} parent=1 // pred_check_branch
      %248 = sbr.rel (0) target = $region21
    $region20: #{classifier_forward.1} parent=1 // pred_region
      %249 = dma.done [#allocation4], 128
    $region21: #{classifier_forward.1} parent=1 // pred_fallthru
      _
    %250 = vsyncpa [#allocation3], 1
    %251 = vsyncpa [#allocation4], 1

</llo_original>
